<compile_context>
chip_gen: v6e
topology: v6e:2x2x1
jax: 0.10.0
libtpu: 0.0.40
codegen_flags: <defaults>
</compile_context>

<pallas_src>
import math
import functools
import numpy as np

import jax
import jax.numpy as jnp
from jax.experimental import pallas as pl
from jax.experimental.pallas import tpu as pltpu

CONST = 10000
NEG_BIG = -1e30
LN_EPS = 1e-5
VMEM_LIMIT = 48 * 1024 * 1024   # safe on v5e/v6e (128 MiB) and v7x (64 MiB)


# --------------------------------------------------------------------------
# Tile-size helper
# --------------------------------------------------------------------------

def _pick_tile(dim, cap, align):
    """Largest tile <= cap that divides `dim` and is a multiple of `align`;
    falls back to the full dim (always legal: block == full array dim)."""
    if dim <= cap:
        return dim
    t = (cap // align) * align
    while t >= align:
        if dim % t == 0:
            return t
        t -= align
    return dim


# --------------------------------------------------------------------------
# In-kernel helpers
# --------------------------------------------------------------------------

def _ln_inner(x, g, b, eps):
    mu = jnp.mean(x, axis=-1, keepdims=True)
    xc = x - mu
    var = jnp.mean(xc * xc, axis=-1, keepdims=True)
    return xc * jax.lax.rsqrt(var + eps) * g + b


def _mha_core(q, kv, bias, ow_heads, head_dim):
    """Batched (over heads) attention + output projection.

    q:  (H, Tq, hd) f32   projected queries
    kv: (H, Tk, hd) f32   projected keys (== values: shared-weight bug)
    bias: (Tq, Tk) f32    additive mask bias
    ow_heads: (H, hd, D) bf16 output-projection weight, head-split on host
    returns (Tq, D) f32 (no output bias, no residual)
    """
    scale = 1.0 / math.sqrt(head_dim)
    q_b = q.astype(jnp.bfloat16)
    k_b = kv.astype(jnp.bfloat16)
    s = jnp.einsum('hqd,hkd->hqk', q_b, k_b,
                   preferred_element_type=jnp.float32)           # (H,Tq,Tk)
    s = s * scale + bias[None]
    m = jnp.max(s, axis=-1, keepdims=True)
    p = jnp.exp(s - m)
    inv = pl.reciprocal(jnp.sum(p, axis=-1, keepdims=True), approx=True)
    a = (p * inv).astype(jnp.bfloat16)
    ctx = jnp.einsum('hqk,hkd->hqd', a, k_b,
                     preferred_element_type=jnp.float32)         # (H,Tq,hd)
    out_h = jnp.einsum('hqd,hdo->hqo', ctx.astype(jnp.bfloat16), ow_heads,
                       preferred_element_type=jnp.float32)       # (H,Tq,D)
    return jnp.sum(out_h, axis=0)                                # (Tq, D)


def _project_heads(x_f32, qw_h, qb_h):
    """x: (T, D) f32, qw_h: (H, D, hd) bf16, qb_h: (H, 1, hd) f32
    -> (H, T, hd) f32 projection (one batched matmul, no lane slicing)."""
    H = qw_h.shape[0]
    T, D = x_f32.shape
    x_h = jnp.broadcast_to(x_f32.astype(jnp.bfloat16)[None], (H, T, D))
    return jnp.einsum('htd,hdf->htf', x_h, qw_h,
                      preferred_element_type=jnp.float32) + qb_h


# --------------------------------------------------------------------------
# Fused projection + positional encoding: out = (x @ W + b) * sqrt(D) + PE
# grid = (B, T_tiles, K_tiles), reduction (K) last, f32 accumulator.
# --------------------------------------------------------------------------

def _linear_pe_kernel(x_ref, w_ref, b_ref, pe_ref, o_ref, acc_ref, *, scale):
    k = pl.program_id(2)

    @pl.when(k == 0)
    def _():
        acc_ref[...] = jnp.zeros_like(acc_ref)

    acc_ref[...] += jnp.dot(x_ref[0].astype(jnp.bfloat16), w_ref[...],
                            preferred_element_type=jnp.float32)

    @pl.when(k == pl.num_programs(2) - 1)
    def _():
        o_ref[0] = (acc_ref[...] + b_ref[...]) * scale + pe_ref[...]


def linear_pe(x, w, b, pe, scale):
    """x: (B,T,K) f32, w: (K,N) bf16, b: (1,N) f32, pe: (>=T, N) f32."""
    B, T, K = x.shape
    N = w.shape[1]
    pe_s = pe[:T]
    tt = _pick_tile(T, 512, 8)
    tk = _pick_tile(K, 512, 128)
    return pl.pallas_call(
        functools.partial(_linear_pe_kernel, scale=scale),
        out_shape=jax.ShapeDtypeStruct((B, T, N), jnp.float32),
        grid=(B, T // tt, K // tk),
        in_specs=[
            pl.BlockSpec((1, tt, tk), lambda bb, t, k: (bb, t, k)),
            pl.BlockSpec((tk, N), lambda bb, t, k: (k, 0)),
            pl.BlockSpec((1, N), lambda bb, t, k: (0, 0)),
            pl.BlockSpec((tt, N), lambda bb, t, k: (t, 0)),
        ],
        out_specs=pl.BlockSpec((1, tt, N), lambda bb, t, k: (bb, t, 0)),
        scratch_shapes=[pltpu.VMEM((tt, N), jnp.float32)],
        compiler_params=pltpu.CompilerParams(
            dimension_semantics=("parallel", "parallel", "arbitrary"),
            vmem_limit_bytes=VMEM_LIMIT),
    )(x, w, b, pe_s)


# --------------------------------------------------------------------------
# Fused attention blocks (LN + shared projection + batched MHA + O-proj +
# residual), grid over B; lengths scalar-prefetched, mask built in-kernel.
# --------------------------------------------------------------------------

def _fused_self_attn_kernel(lens_ref, x_ref, g_ref, beta_ref,
                            qw_ref, qb_ref, ow_ref, ob_ref, o_ref,
                            *, causal, eps):
    b = pl.program_id(0)
    x = x_ref[0]                                   # (T, D)
    T = x.shape[0]
    hd = qw_ref.shape[2]

    xn = _ln_inner(x, g_ref[...], beta_ref[...], eps)
    # shared projection (reference bug preserved): q == k == v
    qkv = _project_heads(xn, qw_ref[...], qb_ref[...])          # (H, T, hd)

    length = lens_ref[b]
    kidx = jax.lax.broadcasted_iota(jnp.int32, (T, T), 1)
    mask = kidx >= length
    if causal:
        qidx = jax.lax.broadcasted_iota(jnp.int32, (T, T), 0)
        mask = jnp.logical_or(mask, kidx > qidx)
    bias = jnp.where(mask, NEG_BIG, 0.0)

    out = _mha_core(qkv, qkv, bias, ow_ref[...], hd)
    o_ref[0] = x + out + ob_ref[...]


def _fused_cross_attn_kernel(lens_ref, x_ref, enc_ref, g_ref, beta_ref,
                             qw_ref, qb_ref, ow_ref, ob_ref, o_ref, *, eps):
    b = pl.program_id(0)
    x = x_ref[0]                                   # (Tq, D)
    enc = enc_ref[0]                               # (Tk, D)
    Tq = x.shape[0]
    Tk = enc.shape[0]
    hd = qw_ref.shape[2]

    xn = _ln_inner(x, g_ref[...], beta_ref[...], eps)
    q = _project_heads(xn, qw_ref[...], qb_ref[...])            # (H, Tq, hd)
    # shared projection of enc_out (reference bug preserved): k == v
    kv = _project_heads(enc, qw_ref[...], qb_ref[...])          # (H, Tk, hd)

    length = lens_ref[b]
    kidx = jax.lax.broadcasted_iota(jnp.int32, (Tq, Tk), 1)
    bias = jnp.where(kidx >= length, NEG_BIG, 0.0)

    out = _mha_core(q, kv, bias, ow_ref[...], hd)
    o_ref[0] = x + out + ob_ref[...]


def fused_self_attention(x, lengths, g, beta, p, num_heads, causal):
    B, T, D = x.shape
    hd = D // num_heads
    kern = functools.partial(_fused_self_attn_kernel, causal=causal, eps=LN_EPS)
    return pl.pallas_call(
        kern,
        out_shape=jax.ShapeDtypeStruct((B, T, D), jnp.float32),
        grid_spec=pltpu.PrefetchScalarGridSpec(
            num_scalar_prefetch=1,
            grid=(B,),
            in_specs=[
                pl.BlockSpec((1, T, D), lambda b, lens: (b, 0, 0)),
                pl.BlockSpec((1, D), lambda b, lens: (0, 0)),
                pl.BlockSpec((1, D), lambda b, lens: (0, 0)),
                pl.BlockSpec((num_heads, D, hd), lambda b, lens: (0, 0, 0)),
                pl.BlockSpec((num_heads, 1, hd), lambda b, lens: (0, 0, 0)),
                pl.BlockSpec((num_heads, hd, D), lambda b, lens: (0, 0, 0)),
                pl.BlockSpec((1, D), lambda b, lens: (0, 0)),
            ],
            out_specs=pl.BlockSpec((1, T, D), lambda b, lens: (b, 0, 0)),
        ),
        compiler_params=pltpu.CompilerParams(
            dimension_semantics=("parallel",),
            vmem_limit_bytes=VMEM_LIMIT),
    )(lengths, x, g, beta, p["qw_h"], p["qb_h"], p["ow_h"], p["o_b"])


def fused_cross_attention(x, enc, lengths, g, beta, p, num_heads):
    B, Tq, D = x.shape
    Tk = enc.shape[1]
    hd = D // num_heads
    kern = functools.partial(_fused_cross_attn_kernel, eps=LN_EPS)
    return pl.pallas_call(
        kern,
        out_shape=jax.ShapeDtypeStruct((B, Tq, D), jnp.float32),
        grid_spec=pltpu.PrefetchScalarGridSpec(
            num_scalar_prefetch=1,
            grid=(B,),
            in_specs=[
                pl.BlockSpec((1, Tq, D), lambda b, lens: (b, 0, 0)),
                pl.BlockSpec((1, Tk, D), lambda b, lens: (b, 0, 0)),
                pl.BlockSpec((1, D), lambda b, lens: (0, 0)),
                pl.BlockSpec((1, D), lambda b, lens: (0, 0)),
                pl.BlockSpec((num_heads, D, hd), lambda b, lens: (0, 0, 0)),
                pl.BlockSpec((num_heads, 1, hd), lambda b, lens: (0, 0, 0)),
                pl.BlockSpec((num_heads, hd, D), lambda b, lens: (0, 0, 0)),
                pl.BlockSpec((1, D), lambda b, lens: (0, 0)),
            ],
            out_specs=pl.BlockSpec((1, Tq, D), lambda b, lens: (b, 0, 0)),
        ),
        compiler_params=pltpu.CompilerParams(
            dimension_semantics=("parallel",),
            vmem_limit_bytes=VMEM_LIMIT),
    )(lengths, x, enc, g, beta, p["qw_h"], p["qb_h"], p["ow_h"], p["o_b"])


# --------------------------------------------------------------------------
# Fused FFN block: LN -> linear+ReLU -> linear -> residual
# grid = (row_tiles, Hid_tiles); Hid is the (tiled) reduction axis.
# Optional epilogue LayerNorm (used to fold the final encoder LN).
# --------------------------------------------------------------------------

def _fused_ffn_kernel(*refs, eps, final_ln):
    if final_ln:
        (x_ref, g_ref, beta_ref, w1_ref, b1_ref, w2_ref, b2_ref,
         fg_ref, fb_ref, o_ref, xn_ref, acc_ref) = refs
    else:
        (x_ref, g_ref, beta_ref, w1_ref, b1_ref, w2_ref, b2_ref,
         o_ref, xn_ref, acc_ref) = refs
        fg_ref = fb_ref = None

    j = pl.program_id(1)

    @pl.when(j == 0)
    def _():
        xn_ref[...] = _ln_inner(x_ref[...], g_ref[...], beta_ref[...], eps)
        acc_ref[...] = jnp.zeros_like(acc_ref)

    h = jnp.dot(xn_ref[...].astype(jnp.bfloat16), w1_ref[...],
                preferred_element_type=jnp.float32) + b1_ref[...]
    h = jnp.maximum(h, 0.0)
    acc_ref[...] += jnp.dot(h.astype(jnp.bfloat16), w2_ref[...],
                            preferred_element_type=jnp.float32)

    @pl.when(j == pl.num_programs(1) - 1)
    def _():
        y = x_ref[...] + acc_ref[...] + b2_ref[...]
        if final_ln:
            y = _ln_inner(y, fg_ref[...], fb_ref[...], eps)
        o_ref[...] = y


def fused_ffn(x, g, beta, p, final_ln=None):
    B, T, D = x.shape
    Hid = p["w1"].shape[1]
    rows = B * T
    x2 = x.reshape(rows, D)
    tm = _pick_tile(rows, 512, 8)
    th = _pick_tile(Hid, 2048, 128)

    args = [x2, g, beta, p["w1"], p["b1"], p["w2"], p["b2"]]
    in_specs = [
        pl.BlockSpec((tm, D), lambda i, j: (i, 0)),
        pl.BlockSpec((1, D), lambda i, j: (0, 0)),
        pl.BlockSpec((1, D), lambda i, j: (0, 0)),
        pl.BlockSpec((D, th), lambda i, j: (0, j)),
        pl.BlockSpec((1, th), lambda i, j: (0, j)),
        pl.BlockSpec((th, D), lambda i, j: (j, 0)),
        pl.BlockSpec((1, D), lambda i, j: (0, 0)),
    ]
    if final_ln is not None:
        fg, fb = final_ln
        args += [fg, fb]
        in_specs += [pl.BlockSpec((1, D), lambda i, j: (0, 0)),
                     pl.BlockSpec((1, D), lambda i, j: (0, 0))]

    out = pl.pallas_call(
        functools.partial(_fused_ffn_kernel, eps=LN_EPS,
                          final_ln=final_ln is not None),
        out_shape=jax.ShapeDtypeStruct((rows, D), jnp.float32),
        grid=(rows // tm, Hid // th),
        in_specs=in_specs,
        out_specs=pl.BlockSpec((tm, D), lambda i, j: (i, 0)),
        scratch_shapes=[pltpu.VMEM((tm, D), jnp.float32),
                        pltpu.VMEM((tm, D), jnp.float32)],
        compiler_params=pltpu.CompilerParams(
            dimension_semantics=("parallel", "arbitrary"),
            vmem_limit_bytes=VMEM_LIMIT),
    )(*args)
    return out.reshape(B, T, D)


# --------------------------------------------------------------------------
# Fused output head: final decoder LN -> vocab projection (V tiled, padded to
# a multiple of 128) -> online logsumexp.  Emits logits + per-row LSE; the
# log_softmax gather is logits[idx] - lse (done host-side).
# --------------------------------------------------------------------------

def _head_kernel(x_ref, g_ref, beta_ref, vw_ref, vb_ref,
                 logits_ref, lse_ref, xn_ref, m_ref, s_ref, *, eps):
    j = pl.program_id(1)

    @pl.when(j == 0)
    def _():
        xn_ref[...] = _ln_inner(x_ref[...], g_ref[...], beta_ref[...], eps)
        m_ref[...] = jnp.full_like(m_ref, NEG_BIG)
        s_ref[...] = jnp.zeros_like(s_ref)

    logits = jnp.dot(xn_ref[...].astype(jnp.bfloat16), vw_ref[...],
                     preferred_element_type=jnp.float32) + vb_ref[...]
    logits_ref[...] = logits

    m_prev = m_ref[...]
    m_new = jnp.maximum(m_prev, jnp.max(logits, axis=-1, keepdims=True))
    s_ref[...] = s_ref[...] * jnp.exp(m_prev - m_new) + \
        jnp.sum(jnp.exp(logits - m_new), axis=-1, keepdims=True)
    m_ref[...] = m_new

    @pl.when(j == pl.num_programs(1) - 1)
    def _():
        lse_ref[...] = m_ref[...] + jnp.log(s_ref[...])


def fused_vocab_head(dec, g, beta, vw, vb):
    B, T, D = dec.shape
    Vp = vw.shape[1]
    rows = B * T
    x2 = dec.reshape(rows, D)
    tm = _pick_tile(rows, 512, 8)
    tv = _pick_tile(Vp, 2048, 128)
    logits, lse = pl.pallas_call(
        functools.partial(_head_kernel, eps=LN_EPS),
        out_shape=(jax.ShapeDtypeStruct((rows, Vp), jnp.float32),
                   jax.ShapeDtypeStruct((rows, 1), jnp.float32)),
        grid=(rows // tm, Vp // tv),
        in_specs=[
            pl.BlockSpec((tm, D), lambda i, j: (i, 0)),
            pl.BlockSpec((1, D), lambda i, j: (0, 0)),
            pl.BlockSpec((1, D), lambda i, j: (0, 0)),
            pl.BlockSpec((D, tv), lambda i, j: (0, j)),
            pl.BlockSpec((1, tv), lambda i, j: (0, j)),
        ],
        out_specs=(pl.BlockSpec((tm, tv), lambda i, j: (i, j)),
                   pl.BlockSpec((tm, 1), lambda i, j: (i, 0))),
        scratch_shapes=[pltpu.VMEM((tm, D), jnp.float32),
                        pltpu.VMEM((tm, 1), jnp.float32),
                        pltpu.VMEM((tm, 1), jnp.float32)],
        compiler_params=pltpu.CompilerParams(
            dimension_semantics=("parallel", "arbitrary"),
            vmem_limit_bytes=VMEM_LIMIT),
    )(x2, g, beta, vw, vb)
    return logits.reshape(B, T, Vp), lse.reshape(B, T, 1)


# --------------------------------------------------------------------------
# Model building blocks
# --------------------------------------------------------------------------

def encoder_layer(p, x, vid_lens, num_heads, final_ln=None):
    x = fused_self_attention(x, vid_lens, p["ln1_g"], p["ln1_b"], p["attn"],
                             num_heads, causal=False)
    x = fused_ffn(x, p["ln2_g"], p["ln2_b"], p["ffn"], final_ln=final_ln)
    return x


def decoder_layer(p, x, enc_out, vid_lens, cap_lens, num_heads):
    x = fused_self_attention(x, cap_lens, p["ln1_g"], p["ln1_b"],
                             p["self_attn"], num_heads, causal=True)
    x = fused_cross_attention(x, enc_out, vid_lens, p["ln2_g"], p["ln2_b"],
                              p["cross_attn"], num_heads)
    x = fused_ffn(x, p["ln3_g"], p["ln3_b"], p["ffn"])
    return x


def make_positional_embed(model_size, max_len):
    pe = np.zeros((max_len, model_size), np.float32)
    for i in range(max_len):
        for j in range(0, model_size, 2):
            pe[i, j] = math.sin(i / (CONST ** (j / model_size)))
            pe[i, j + 1] = math.cos(i / (CONST ** (j / model_size)))
    return jnp.asarray(pe)


# --------------------------------------------------------------------------
# Parameter initialization (deterministic, in-script; kernel-ready layouts)
# --------------------------------------------------------------------------

def _init_linear(key, d_in, d_out):
    k1, k2 = jax.random.split(key)
    s = 1.0 / math.sqrt(d_in)
    w = jax.random.uniform(k1, (d_in, d_out), jnp.float32, -s, s)
    b = jax.random.uniform(k2, (1, d_out), jnp.float32, -s, s)
    return w, b


def _init_mha(key, d, num_heads):
    kq, ko = jax.random.split(key)
    qw, qb = _init_linear(kq, d, d)
    ow, ob = _init_linear(ko, d, d)
    hd = d // num_heads
    return {
        # host-side one-time head split + bf16 cast (kernel-ready layout):
        "qw_h": qw.reshape(d, num_heads, hd).transpose(1, 0, 2)
                  .astype(jnp.bfloat16),                         # (H, D, hd)
        "qb_h": qb.reshape(num_heads, hd)[:, None, :],           # (H, 1, hd)
        "ow_h": ow.reshape(num_heads, hd, d).astype(jnp.bfloat16),  # (H, hd, D)
        "o_b": ob,                                               # (1, D)
    }


def _init_ffn(key, d, h):
    k1, k2 = jax.random.split(key)
    w1, b1 = _init_linear(k1, d, h)
    w2, b2 = _init_linear(k2, h, d)
    return {"w1": w1.astype(jnp.bfloat16), "b1": b1,
            "w2": w2.astype(jnp.bfloat16), "b2": b2}


def _ln(d):
    return jnp.ones((1, d), jnp.float32), jnp.zeros((1, d), jnp.float32)


def _init_enc_layer(key, d, h, num_heads):
    k1, k2 = jax.random.split(key)
    g1, b1 = _ln(d)
    g2, b2 = _ln(d)
    return {"attn": _init_mha(k1, d, num_heads),
            "ffn": _init_ffn(k2, d, h),
            "ln1_g": g1, "ln1_b": b1, "ln2_g": g2, "ln2_b": b2}


def _init_dec_layer(key, d, h, num_heads):
    k1, k2, k3 = jax.random.split(key, 3)
    g1, b1 = _ln(d)
    g2, b2 = _ln(d)
    g3, b3 = _ln(d)
    return {"self_attn": _init_mha(k1, d, num_heads),
            "cross_attn": _init_mha(k2, d, num_heads),
            "ffn": _init_ffn(k3, d, h),
            "ln1_g": g1, "ln1_b": b1, "ln2_g": g2, "ln2_b": b2,
            "ln3_g": g3, "ln3_b": b3}


def make_params(key, cfg):
    keys = jax.random.split(key, 8)
    d = cfg["model_size"]
    H = cfg["num_heads"]
    V = cfg["vocab_size"]
    Vp = -(-V // 128) * 128            # pad vocab to multiple of 128 lanes

    params = {}
    fw, fb = _init_linear(keys[0], cfg["input_feature_size"], d)
    params["feat_w"], params["feat_b"] = fw.astype(jnp.bfloat16), fb
    ew, eb = _init_linear(keys[1], cfg["embed_size"], d)
    params["emb_w"], params["emb_b"] = ew.astype(jnp.bfloat16), eb

    vw, vb = _init_linear(keys[2], d, V)
    params["vocab_w"] = jnp.pad(vw, ((0, 0), (0, Vp - V))).astype(jnp.bfloat16)
    params["vocab_b"] = jnp.pad(vb, ((0, 0), (0, Vp - V)),
                                constant_values=NEG_BIG)

    emb = jax.random.normal(keys[3], (V, cfg["embed_size"]), jnp.float32) * 0.1
    emb = emb.at[cfg["pad_id"]].set(0.0)   # nn.Embedding padding_idx row = 0
    params["embed"] = emb

    params["enc_layers"] = [
        _init_enc_layer(k, d, cfg["hidden_size"], H)
        for k in jax.random.split(keys[4], cfg["num_enc_layers"])]
    params["dec_layers"] = [
        _init_dec_layer(k, d, cfg["hidden_size"], H)
        for k in jax.random.split(keys[5], cfg["num_dec_layers"])]
    params["enc_ln_g"], params["enc_ln_b"] = _ln(d)
    params["dec_ln_g"], params["dec_ln_b"] = _ln(d)
    params["pe_enc"] = make_positional_embed(d, cfg["max_len_vid"])
    params["pe_dec"] = make_positional_embed(d, cfg["max_len_caption"])
    return params


# --------------------------------------------------------------------------
# Full forward pass (matches Transformer.forward; dropout = identity)
# --------------------------------------------------------------------------

def transformer_forward(params, vids_padded, vid_lengths,
                        captions_padded, cap_lengths, cfg):
    B, Tv, _ = vids_padded.shape
    Tc = captions_padded.shape[1]
    D = cfg["model_size"]
    H = cfg["num_heads"]
    sqrt_d = math.sqrt(D)

    vid_lens = jnp.asarray(vid_lengths, jnp.int32)
    cap_lens = jnp.asarray(cap_lengths, jnp.int32)

    cap_ex_last = captions_padded[:, :-1]                           # (B,Tc-1)
    cap_emb = jnp.take(params["embed"], cap_ex_last, axis=0)        # (B,Tc-1,E)

    # ---- Encoder: feature projection fused with positional encoding ----
    enc = linear_pe(vids_padded, params["feat_w"], params["feat_b"],
                    params["pe_enc"], sqrt_d)                       # (B,Tv,D)
    n_enc = len(params["enc_layers"])
    for i, lp in enumerate(params["enc_layers"]):
        fin = (params["enc_ln_g"], params["enc_ln_b"]) if i == n_enc - 1 else None
        enc = encoder_layer(lp, enc, vid_lens, H, final_ln=fin)

    # ---- Decoder: embedding projection fused with positional encoding ----
    dec = linear_pe(cap_emb, params["emb_w"], params["emb_b"],
                    params["pe_dec"], sqrt_d)                       # (B,Tc-1,D)
    for lp in params["dec_layers"]:
        dec = decoder_layer(lp, dec, enc, vid_lens, cap_lens, H)

    # ---- Output head: final decoder LN + vocab proj + online LSE fused ----
    logits, lse = fused_vocab_head(dec, params["dec_ln_g"], params["dec_ln_b"],
                                   params["vocab_w"], params["vocab_b"])
    logits_t = jnp.transpose(logits, (1, 0, 2))                     # (Tc-1,B,Vp)
    lse_t = jnp.transpose(lse, (1, 0, 2))[..., 0]                   # (Tc-1,B)

    cap_t = captions_padded.T                                       # (Tc,B)
    target_masks = (cap_t != cfg["pad_id"]).astype(jnp.float32)     # (Tc,B)
    idx = cap_t[1:]                                                 # (Tc-1,B)
    gathered = jnp.take_along_axis(logits_t, idx[..., None], axis=-1)[..., 0]
    tlp = (gathered - lse_t) * target_masks[1:]                     # (Tc-1,B)
    prob = jnp.exp(tlp)
    scores = jnp.sum(tlp, axis=0)                                   # (B,)
    return scores, prob, tlp


# --------------------------------------------------------------------------
# Demo / main
# --------------------------------------------------------------------------

if __name__ == "__main__":
    cfg = {
        "input_feature_size": 32,
        "embed_size": 32,
        "model_size": 64,
        "num_heads": 4,
        "hidden_size": 128,
        "max_len_vid": 8,
        "max_len_caption": 8,
        "num_enc_layers": 3,
        "num_dec_layers": 2,
        "pad_id": 0,
    }

    # In-script vocab (replaces the json.load in __init__)
    words = ["<pad>", "<start>", "<end>", "<unk>",
             "a", "b", "c", "d", "e", "f", "g", "h", "i", "j", "k", "l"]
    vocab = {w: i for i, w in enumerate(words)}
    cfg["vocab_size"] = len(vocab)

    key = jax.random.PRNGKey(0)
    kp, kv = jax.random.split(key)
    params = make_params(kp, cfg)

    # pad_vid_frames: videos already sorted by length (desc), zero-padded
    vid_lengths = [8, 5]
    B = len(vid_lengths)
    Tv = cfg["max_len_vid"]
    feats = jax.random.normal(kv, (B, Tv, cfg["input_feature_size"]), jnp.float32)
    pad_pos = jnp.arange(Tv)[None, :, None] >= jnp.asarray(vid_lengths)[:, None, None]
    vids_padded = jnp.where(pad_pos, 0.0, feats)

    # pad_captions: <start> + words + <end> + <pad>..., sorted by length (desc)
    raw_captions = [["a", "b", "c", "d"], ["e", "f"]]
    Tc = cfg["max_len_caption"]
    cap_lengths = [len(s) + 2 for s in raw_captions]
    cap_rows = []
    for s in raw_captions:
        ids = [vocab["<start>"]] + [vocab.get(w, vocab["<unk>"]) for w in s] \
              + [vocab["<end>"]] + [vocab["<pad>"]] * ((Tc - 2) - len(s))
        cap_rows.append(ids)
    captions_padded = jnp.asarray(cap_rows, dtype=jnp.int32)          # (B, Tc)

    scores, prob, tlp = transformer_forward(
        params, vids_padded, vid_lengths, captions_padded, cap_lengths, cfg)

    jax.block_until_ready(scores)
    jax.block_until_ready(prob)
    jax.block_until_ready(tlp)

    assert scores.shape == (B,)
    assert prob.shape == (Tc - 1, B)
    assert tlp.shape == (Tc - 1, B)
    assert bool(jnp.all(jnp.isfinite(scores)))

    # TODO(synk): beam_search (host-side control flow) and stochastic dropout
    # are not translated; dropout is treated as identity (eval mode).
    print("KERNEL_OK")
</pallas_src>

<mosaic_0001>
module attributes {stable_mosaic.version = 11 : i64} {
  func.func @_linear_pe_kernel(%arg0: i32, %arg1: i32, %arg2: i32, %arg3: memref<1x8x32xf32, #tpu.memory_space<vmem>>, %arg4: memref<32x64xbf16, #tpu.memory_space<vmem>>, %arg5: memref<1x64xf32, #tpu.memory_space<vmem>>, %arg6: memref<8x64xf32, #tpu.memory_space<vmem>>, %arg7: memref<1x8x64xf32, #tpu.memory_space<vmem>>, %arg8: memref<8x64xf32, #tpu.memory_space<vmem>>) attributes {dimension_semantics = [#tpu.dimension_semantics<parallel>, #tpu.dimension_semantics<parallel>, #tpu.dimension_semantics<arbitrary>], iteration_bounds = array<i64: 2, 1, 1>, scalar_prefetch = 0 : i64, scratch_operands = 1 : i64, tpu.core_type = #tpu.core_type<tc>, window_params = [{transform_indices = @transform_0, window_bounds = array<i64: 1, 8, 32>}, {transform_indices = @transform_1, window_bounds = array<i64: 32, 64>}, {pipeline_mode = #tpu.pipeline_mode<synchronous>, transform_indices = @transform_2, window_bounds = array<i64: 1, 64>}, {transform_indices = @transform_3, window_bounds = array<i64: 8, 64>}, {transform_indices = @transform_4, window_bounds = array<i64: 1, 8, 64>}]} {
    %c0_i32 = arith.constant 0 : i32
    %0 = arith.cmpi eq, %arg2, %c0_i32 : i32
    %1 = arith.extui %0 : i1 to i32
    %c0_i32_0 = arith.constant 0 : i32
    %2 = arith.cmpi ne, %1, %c0_i32_0 : i32
    scf.if %2 {
      %cst_11 = arith.constant 0.000000e+00 : f32
      %14 = vector.broadcast %cst_11 : f32 to vector<8x64xf32>
      %c0_12 = arith.constant 0 : index
      %c0_13 = arith.constant 0 : index
      %15 = vector.load %arg8[%c0_12, %c0_13] : memref<8x64xf32, #tpu.memory_space<vmem>>, vector<8x64xf32>
      tpu.vector_store %arg8[%c0_12, %c0_13], %14 {strides = array<i32>} : memref<8x64xf32, #tpu.memory_space<vmem>>, vector<8x64xf32>,
    } else {
    }
    %c0 = arith.constant 0 : index
    %c0_1 = arith.constant 0 : index
    %3 = vector.load %arg8[%c0, %c0_1] : memref<8x64xf32, #tpu.memory_space<vmem>>, vector<8x64xf32>
    %c0_2 = arith.constant 0 : index
    %c0_3 = arith.constant 0 : index
    %c0_4 = arith.constant 0 : index
    %4 = vector.load %arg3[%c0_2, %c0_3, %c0_4] : memref<1x8x32xf32, #tpu.memory_space<vmem>>, vector<1x8x32xf32>
    %5 = vector.shape_cast %4 : vector<1x8x32xf32> to vector<8x32xf32>
    %6 = arith.truncf %5 : vector<8x32xf32> to vector<8x32xbf16>
    %c0_5 = arith.constant 0 : index
    %c0_6 = arith.constant 0 : index
    %7 = vector.load %arg4[%c0_5, %c0_6] : memref<32x64xbf16, #tpu.memory_space<vmem>>, vector<32x64xbf16>
    %cst = arith.constant dense<0.000000e+00> : vector<8x64xf32>
    %8 = tpu.matmul %6, %7, %cst {dimension_numbers = #tpu.dot_dimension_numbers<[1], [0], [0], [1], [0, 0, 1, 1], [], []>} : vector<8x32xbf16>, vector<32x64xbf16>, vector<8x64xf32> -> vector<8x64xf32>
    %9 = arith.addf %3, %8 : vector<8x64xf32>
    %c0_7 = arith.constant 0 : index
    %c0_8 = arith.constant 0 : index
    %10 = vector.load %arg8[%c0_7, %c0_8] : memref<8x64xf32, #tpu.memory_space<vmem>>, vector<8x64xf32>
    tpu.vector_store %arg8[%c0_7, %c0_8], %9 {strides = array<i32>} : memref<8x64xf32, #tpu.memory_space<vmem>>, vector<8x64xf32>,
    %c0_i32_9 = arith.constant 0 : i32
    %11 = arith.cmpi eq, %arg2, %c0_i32_9 : i32
    %12 = arith.extui %11 : i1 to i32
    %c0_i32_10 = arith.constant 0 : i32
    %13 = arith.cmpi ne, %12, %c0_i32_10 : i32
    scf.if %13 {
      %c0_11 = arith.constant 0 : index
      %c0_12 = arith.constant 0 : index
      %14 = vector.load %arg8[%c0_11, %c0_12] : memref<8x64xf32, #tpu.memory_space<vmem>>, vector<8x64xf32>
      %c0_13 = arith.constant 0 : index
      %c0_14 = arith.constant 0 : index
      %15 = vector.load %arg5[%c0_13, %c0_14] : memref<1x64xf32, #tpu.memory_space<vmem>>, vector<1x64xf32>
      %16 = vector.broadcast %15 : vector<1x64xf32> to vector<8x64xf32>
      %17 = arith.addf %14, %16 : vector<8x64xf32>
      %cst_15 = arith.constant 8.000000e+00 : f32
      %18 = vector.broadcast %cst_15 : f32 to vector<8x64xf32>
      %19 = arith.mulf %17, %18 : vector<8x64xf32>
      %c0_16 = arith.constant 0 : index
      %c0_17 = arith.constant 0 : index
      %20 = vector.load %arg6[%c0_16, %c0_17] : memref<8x64xf32, #tpu.memory_space<vmem>>, vector<8x64xf32>
      %21 = arith.addf %19, %20 : vector<8x64xf32>
      %c0_18 = arith.constant 0 : index
      %c0_19 = arith.constant 0 : index
      %c0_20 = arith.constant 0 : index
      %22 = vector.load %arg7[%c0_18, %c0_19, %c0_20] : memref<1x8x64xf32, #tpu.memory_space<vmem>>, vector<1x8x64xf32>
      %23 = vector.shape_cast %22 : vector<1x8x64xf32> to vector<8x64xf32>
      %24 = vector.shape_cast %21 : vector<8x64xf32> to vector<1x8x64xf32>
      tpu.vector_store %arg7[%c0_18, %c0_19, %c0_20], %24 {strides = array<i32>} : memref<1x8x64xf32, #tpu.memory_space<vmem>>, vector<1x8x64xf32>,
    } else {
    }
    return
  }
  func.func @transform_0(%arg0: i32, %arg1: i32, %arg2: i32) -> (i32, i32, i32) {
    %c0_i32 = arith.constant 0 : i32
    return %arg0, %arg1, %arg2 : i32, i32, i32
  }
  func.func @transform_1(%arg0: i32, %arg1: i32, %arg2: i32) -> (i32, i32) {
    %c0_i32 = arith.constant 0 : i32
    %c0_i32_0 = arith.constant 0 : i32
    return %arg2, %c0_i32 : i32, i32
  }
  func.func @transform_2(%arg0: i32, %arg1: i32, %arg2: i32) -> (i32, i32) {
    %c0_i32 = arith.constant 0 : i32
    %c0_i32_0 = arith.constant 0 : i32
    %c0_i32_1 = arith.constant 0 : i32
    return %c0_i32, %c0_i32_0 : i32, i32
  }
  func.func @transform_3(%arg0: i32, %arg1: i32, %arg2: i32) -> (i32, i32) {
    %c0_i32 = arith.constant 0 : i32
    %c0_i32_0 = arith.constant 0 : i32
    return %arg1, %c0_i32 : i32, i32
  }
  func.func @transform_4(%arg0: i32, %arg1: i32, %arg2: i32) -> (i32, i32, i32) {
    %c0_i32 = arith.constant 0 : i32
    %c0_i32_0 = arith.constant 0 : i32
    return %arg0, %arg1, %c0_i32 : i32, i32, i32
  }
}

</mosaic_0001>

<llo_original>
// kernel: tpu_custom_call.1
$region0: #{tpu_custom_call.1}
  #allocation0 [shape = 'u32[]', space=smem, size = 0x4, offset = 0x4, fixed_abs, tag = 'smem constant byte address 0x4 - core index']
  #allocation1 [shape = 'u32[144,128]{1,0:T(1,128)}', space=vmem, size = 0x12000, scoped, tag = 'internal scratch']
  #allocation2 [shape = 'f32[8,64]{1,0:T(8,128)}', space=vmem, size = 0x1000, scoped, tag = 'scratch operand']
  %s0 = inlined_call_operand.hbm [shape: f32[2,8,32], index: 0, kind: input, shape index: {}]
  %s1 = inlined_call_operand.hbm [shape: bf16[32,64], index: 1, kind: input, shape index: {}]
  %s2 = inlined_call_operand.vmem [shape: f32[1,64], index: 2, kind: input, shape index: {}]
  %s3 = inlined_call_operand.hbm [shape: f32[8,64], index: 3, kind: input, shape index: {}]
  %s4 = inlined_call_operand.hbm [shape: f32[2,8,64], index: 4, kind: output, shape index: {}]
  %s5 = sld [smem:[#allocation0]]
  $region69: #{tpu_custom_call.1} parent=0
    _
  %s7 = ssub.s32 1, %s5
  %s8 = scalar_select 0, %s7, %s5
  $region1: #{tpu_custom_call.1} parent=0
    #allocation3 [shape = 'u8[8192]{0}', space=vmem, size = 0x2000, scoped, tag = 'input window, operand 0']
    #allocation4 [shape = 's32[2]{0}', space=sflag, size = 0x8, scoped, tag = 'scoped memory for tpu_custom_call.1']
    #allocation5 [shape = 's32[2]{0}', space=sflag, size = 0x8, scoped, tag = 'scoped memory for tpu_custom_call.1']
    #allocation6 [shape = 'u8[8192]{0}', space=vmem, size = 0x2000, scoped, tag = 'input window, operand 1, single buffered']
    #allocation7 [shape = 's32[1]{0}', space=sflag, size = 0x4, scoped, tag = 'scoped memory for tpu_custom_call.1']
    #allocation8 [shape = 'u8[4096]{0}', space=vmem, size = 0x1000, scoped, tag = 'input window, operand 3, single buffered']
    #allocation9 [shape = 'u8[8192]{0}', space=vmem, size = 0x2000, scoped, tag = 'output window, operand 0']
    %9 = vsyncpa [#allocation4], 0
    %s10 = scalar_lea.sflag [#allocation4], 1
    %11 = vsyncpa %s10, 0
    %12 = vsyncpa [#allocation7], 0
    %13 = vsyncpa [#allocation5], 0
    %s14 = scalar_lea.sflag [#allocation5], 1
    %15 = vsyncpa %s14, 0
    loop: start=0, step=1, limit=4
    $region2: #{tpu_custom_call.1} parent=1 // loop_pre_header
      _
    $region3: #{tpu_custom_call.1} parent=1 // loop_header
      %s17 = sphi 0, %s21
      %p18 = scmp.ge.s32.totalorder %s17, 4
      %s24 = sphi 0, %s43
      %s25 = sphi 0, %s39
      %s26 = sphi 0, %s35
      %s27 = sphi 0, %s24
      %s28 = sphi 0, %s25
      %s29 = sphi 0, %s26
      %s30 = sphi 0, %s27
      %s31 = sphi 0, %s28
      %s32 = sphi 0, %s29
      %s50 = sphi 0, %s52
      %s53 = sphi 0, %s50
      %s54 = sphi 0, %s53
      %s70 = sphi 0, %s54
      %s76 = sphi 0, %s78
      %s79 = sphi 0, %s76
      %s80 = sphi 0, %s79
      %s96 = sphi 0, %s80
      %s100 = sphi 0, %s100
      %s102 = sphi 0, %s100
      %s103 = sphi 0, %s102
      %s117 = sphi 0, %s103
      %s123 = sphi 0, %s125
      %s126 = sphi 0, %s123
      %s127 = sphi 0, %s126
      %s143 = sphi 0, %s127
      %s151 = sphi 0, %s153
      %s154 = sphi 0, %s151
      %s155 = sphi 0, %s154
      %s171 = sphi 0, %s155
    $region4: #{tpu_custom_call.1} parent=1 // loop_header_branch
      %20 = sbr.rel (%p18) target = $region8
    $region5: #{tpu_custom_call.1} parent=1 // loop_body
      %s22 = ssub.s32 %s17, 1
      %s23 = ssub.s32 %s17, 2
      %s33 = sadd.s32 1, %s26
      %p34 = scmp.ge.s32.totalorder %s33, 1
      %s35 = scalar_select %p34, 0, %s33
      %s36 = sadd.s32 1, %s25
      %s37 = scalar_select %p34, %s36, %s25
      %p38 = scmp.ge.s32.totalorder %s37, 1
      %s39 = scalar_select %p38, 0, %s37
      %s40 = sadd.s32 1, %s24
      %s41 = scalar_select %p38, %s40, %s24
      %p42 = scmp.ge.s32.totalorder %s41, 2
      %s43 = scalar_select %p42, 0, %s41
      %s44 = ssub.s32 %s24, %s43
      %s45 = ssub.s32 %s25, %s39
      %s46 = sor.u32 %s44, %s45
      %s47 = ssub.s32 %s26, %s35
      %s48 = sor.u32 %s46, %s47
      %p49 = scmp.eq.s32.totalorder %s48, 0
      %s51 = sadd.s32 %s50, 1
      %s52 = scalar_select %p49, %s50, %s51
      %p55 = pneg %p49
      %p56 = scmp.eq.s32.totalorder %s17, 1
      %p57 = por %p55, %p56
      %p58 = scmp.ne.s32.totalorder %s50, %s53
      %p59 = scmp.eq.s32.totalorder %s17, 0
      %p60 = por %p58, %p59
      %p61 = scmp.ne.s32.totalorder %s50, %s53
      %p62 = scmp.eq.s32.totalorder %s22, 1
      %p63 = por %p61, %p62
      %p64 = scmp.ne.s32.totalorder %s53, %s54
      %p65 = scmp.eq.s32.totalorder %s22, 0
      %p66 = por %p64, %p65
      %p67 = scmp.ne.s32.totalorder %s53, %s54
      %p68 = scmp.eq.s32.totalorder %s23, 1
      %p69 = por %p67, %p68
      %p71 = scmp.ne.s32.totalorder %s54, %s70
      %p72 = scmp.eq.s32.totalorder %s23, 0
      %p73 = por %p71, %p72
      %s74 = ssub.s32 %s26, %s35
      %p75 = scmp.eq.s32.totalorder %s74, 0
      %s77 = sadd.s32 %s76, 1
      %s78 = scalar_select %p75, %s76, %s77
      %p81 = pneg %p75
      %p82 = scmp.eq.s32.totalorder %s17, 1
      %p83 = por %p81, %p82
      %p84 = scmp.ne.s32.totalorder %s76, %s79
      %p85 = scmp.eq.s32.totalorder %s17, 0
      %p86 = por %p84, %p85
      %p87 = scmp.ne.s32.totalorder %s76, %s79
      %p88 = scmp.eq.s32.totalorder %s22, 1
      %p89 = por %p87, %p88
      %p90 = scmp.ne.s32.totalorder %s79, %s80
      %p91 = scmp.eq.s32.totalorder %s22, 0
      %p92 = por %p90, %p91
      %p93 = scmp.ne.s32.totalorder %s79, %s80
      %p94 = scmp.eq.s32.totalorder %s23, 1
      %p95 = por %p93, %p94
      %p97 = scmp.ne.s32.totalorder %s80, %s96
      %p98 = scmp.eq.s32.totalorder %s23, 0
      %p99 = por %p97, %p98
      %s101 = sadd.s32 %s100, 1
      %p104 = scmp.eq.s32.totalorder %s17, 1
      %p105 = scmp.ne.s32.totalorder %s100, %s102
      %p106 = scmp.eq.s32.totalorder %s17, 0
      %p107 = por %p105, %p106
      %p108 = scmp.ne.s32.totalorder %s100, %s102
      %p109 = scmp.eq.s32.totalorder %s22, 1
      %p110 = por %p108, %p109
      %p111 = scmp.ne.s32.totalorder %s102, %s103
      %p112 = scmp.eq.s32.totalorder %s22, 0
      %p113 = por %p111, %p112
      %p114 = scmp.ne.s32.totalorder %s102, %s103
      %p115 = scmp.eq.s32.totalorder %s23, 1
      %p116 = por %p114, %p115
      %p118 = scmp.ne.s32.totalorder %s103, %s117
      %p119 = scmp.eq.s32.totalorder %s23, 0
      %p120 = por %p118, %p119
      %s121 = ssub.s32 %s25, %s39
      %p122 = scmp.eq.s32.totalorder %s121, 0
      %s124 = sadd.s32 %s123, 1
      %s125 = scalar_select %p122, %s123, %s124
      %p128 = pneg %p122
      %p129 = scmp.eq.s32.totalorder %s17, 1
      %p130 = por %p128, %p129
      %p131 = scmp.ne.s32.totalorder %s123, %s126
      %p132 = scmp.eq.s32.totalorder %s17, 0
      %p133 = por %p131, %p132
      %p134 = scmp.ne.s32.totalorder %s123, %s126
      %p135 = scmp.eq.s32.totalorder %s22, 1
      %p136 = por %p134, %p135
      %p137 = scmp.ne.s32.totalorder %s126, %s127
      %p138 = scmp.eq.s32.totalorder %s22, 0
      %p139 = por %p137, %p138
      %p140 = scmp.ne.s32.totalorder %s126, %s127
      %p141 = scmp.eq.s32.totalorder %s23, 1
      %p142 = por %p140, %p141
      %p144 = scmp.ne.s32.totalorder %s127, %s143
      %p145 = scmp.eq.s32.totalorder %s23, 0
      %p146 = por %p144, %p145
      %s147 = ssub.s32 %s24, %s43
      %s148 = ssub.s32 %s25, %s39
      %s149 = sor.u32 %s147, %s148
      %p150 = scmp.eq.s32.totalorder %s149, 0
      %s152 = sadd.s32 %s151, 1
      %s153 = scalar_select %p150, %s151, %s152
      %p156 = pneg %p150
      %p157 = scmp.eq.s32.totalorder %s17, 1
      %p158 = por %p156, %p157
      %p159 = scmp.ne.s32.totalorder %s151, %s154
      %p160 = scmp.eq.s32.totalorder %s17, 0
      %p161 = por %p159, %p160
      %p162 = scmp.ne.s32.totalorder %s151, %s154
      %p163 = scmp.eq.s32.totalorder %s22, 1
      %p164 = por %p162, %p163
      %p165 = scmp.ne.s32.totalorder %s154, %s155
      %p166 = scmp.eq.s32.totalorder %s22, 0
      %p167 = por %p165, %p166
      %p168 = scmp.ne.s32.totalorder %s154, %s155
      %p169 = scmp.eq.s32.totalorder %s23, 1
      %p170 = por %p168, %p169
      %p172 = scmp.ne.s32.totalorder %s155, %s171
      %p173 = scmp.eq.s32.totalorder %s23, 0
      %p174 = por %p172, %p173
      %p175 = scmp.le.s32.totalorder 1, %s17
      %p176 = scmp.lt.s32.totalorder %s17, 3
      %p177 = pnand %p175, %p176
      %p178 = pneg %p177
      // Predicated region
      $region9: #{tpu_custom_call.1} parent=5 // pred_check
        _
      $region10: #{tpu_custom_call.1} parent=5 // pred_check_branch
        %180 = sbr.rel (%p177) target = $region12
      $region11: #{tpu_custom_call.1} parent=5 // pred_region
        %s181 = ssub.s32 %s17, 1
        // Predicated region
        $region13: #{tpu_custom_call.1} parent=11 // pred_check
          %p182 = pneg %p92
        $region14: #{tpu_custom_call.1} parent=11 // pred_check_branch
          %184 = sbr.rel (%p182) target = $region16
        $region15: #{tpu_custom_call.1} parent=11 // pred_region
          %s185 = smul.u32 4, %s29
          %s187 = ssub.s32 256, 256
          %188 = vsyncadd [#allocation7], %s187
          %s189 = smul.addr %s185, 64
          %s190 = scalar_lea.hbm %s1, %s189
          %s191 = sshll.u32 [#allocation6], 4
          %s192 = int_to_ptr.vmem [resolvable:$true] %s191
          %197 = dma.hbm_to_vmem [thread:$0]  %s190, 256, %s192, [#allocation7], 64, 64, 4
        $region16: #{tpu_custom_call.1} parent=11 // pred_fallthru
          _
        // Predicated region
        $region17: #{tpu_custom_call.1} parent=11 // pred_check
          %p198 = pneg %p113
        $region18: #{tpu_custom_call.1} parent=11 // pred_check_branch
          %200 = sbr.rel (%p198) target = $region20
        $region19: #{tpu_custom_call.1} parent=11 // pred_region
          _
        $region20: #{tpu_custom_call.1} parent=11 // pred_fallthru
          _
        // Predicated region
        $region21: #{tpu_custom_call.1} parent=11 // pred_check
          %p201 = pneg %p139
        $region22: #{tpu_custom_call.1} parent=11 // pred_check_branch
          %203 = sbr.rel (%p201) target = $region24
        $region23: #{tpu_custom_call.1} parent=11 // pred_region
          %s205 = ssub.s32 128, 128
          %206 = vsyncadd [#allocation7], %s205
          %s207 = smul.addr %s28, 128
          %s208 = scalar_lea.hbm %s3, %s207
          %s210 = sshll.u32 [#allocation8], 4
          %s211 = int_to_ptr.vmem [resolvable:$true] %s210
          %213 = dma.hbm_to_vmem [thread:$0]  %s208, 128, %s211, [#allocation7]
        $region24: #{tpu_custom_call.1} parent=11 // pred_fallthru
          _
      $region12: #{tpu_custom_call.1} parent=5 // pred_fallthru
        _
      %p214 = scmp.lt.s32.totalorder %s17, 2
      // Predicated region
      $region25: #{tpu_custom_call.1} parent=5 // pred_check
        %p215 = pneg %p214
      $region26: #{tpu_custom_call.1} parent=5 // pred_check_branch
        %217 = sbr.rel (%p215) target = $region28
      $region27: #{tpu_custom_call.1} parent=5 // pred_region
        // Predicated region
        $region29: #{tpu_custom_call.1} parent=27 // pred_check
          %p218 = pneg %p60
        $region30: #{tpu_custom_call.1} parent=27 // pred_check_branch
          %220 = sbr.rel (%p218) target = $region32
        $region31: #{tpu_custom_call.1} parent=27 // pred_region
          %s221 = sand.u32 %s50, 1
          %s222 = scalar_lea.sflag [#allocation4], %s221
          %s223 = sand.u32 %s50, 1
          %s224 = smul.addr %s223, 8
          %s225 = scalar_lea.vmem [#allocation3], %s224
          %s227 = ssub.s32 128, 128
          %228 = vsyncadd %s222, %s227
          %s229 = sadd.s32 %s26, %s25
          %s230 = sadd.s32 %s229, %s24
          %s231 = smul.addr %s230, 128
          %s232 = scalar_lea.hbm %s0, %s231
          %s234 = sshll.u32 %s225, 4
          %s235 = int_to_ptr.vmem [resolvable:$true] %s234
          %237 = dma.hbm_to_vmem [thread:$0]  %s232, 128, %s235, %s222
        $region32: #{tpu_custom_call.1} parent=27 // pred_fallthru
          _
      $region28: #{tpu_custom_call.1} parent=5 // pred_fallthru
        _
      %p238 = scmp.le.s32.totalorder 1, %s17
      %p239 = scmp.lt.s32.totalorder %s17, 3
      %p240 = pnand %p238, %p239
      %p241 = pneg %p240
      // Predicated region
      $region33: #{tpu_custom_call.1} parent=5 // pred_check
        _
      $region34: #{tpu_custom_call.1} parent=5 // pred_check_branch
        %243 = sbr.rel (%p240) target = $region36
      $region35: #{tpu_custom_call.1} parent=5 // pred_region
        %s244 = ssub.s32 %s17, 1
        %s245 = sand.u32 %s53, 1
        %s246 = scalar_lea.sflag [#allocation4], %s245
        %s247 = sand.u32 %s53, 1
        %s248 = smul.addr %s247, 8
        %s249 = scalar_lea.vmem [#allocation3], %s248
        // Predicated region
        $region37: #{tpu_custom_call.1} parent=35 // pred_check
          %p250 = pneg %p66
        $region38: #{tpu_custom_call.1} parent=35 // pred_check_branch
          %252 = sbr.rel (%p250) target = $region40
        $region39: #{tpu_custom_call.1} parent=35 // pred_region
          %253 = dma.done %s246, 128
        $region40: #{tpu_custom_call.1} parent=35 // pred_fallthru
          _
        // Predicated region
        $region41: #{tpu_custom_call.1} parent=35 // pred_check
          %p254 = pneg %p92
        $region42: #{tpu_custom_call.1} parent=35 // pred_check_branch
          %256 = sbr.rel (%p254) target = $region44
        $region43: #{tpu_custom_call.1} parent=35 // pred_region
          %257 = dma.done [#allocation7], 256
        $region44: #{tpu_custom_call.1} parent=35 // pred_fallthru
          _
        // Predicated region
        $region45: #{tpu_custom_call.1} parent=35 // pred_check
          %p258 = pneg %p139
        $region46: #{tpu_custom_call.1} parent=35 // pred_check_branch
          %260 = sbr.rel (%p258) target = $region48
        $region47: #{tpu_custom_call.1} parent=35 // pred_region
          %261 = dma.done [#allocation7], 128
        $region48: #{tpu_custom_call.1} parent=35 // pred_fallthru
          _
        %s262 = sand.u32 %s53, 1
        %s263 = scalar_lea.sflag [#allocation4], %s262
        %s264 = sand.u32 %s53, 1
        %s265 = smul.addr %s264, 8
        %s266 = scalar_lea.vmem [#allocation3], %s265
        %p267 = pneg %p66
        %p268 = pneg %p63
        %p269 = pneg %p92
        %p270 = pneg %p89
        %p271 = pneg %p113
        %p272 = pneg %p110
        %p273 = pneg %p139
        %p274 = pneg %p136
        %p275 = pneg %p167
        %p276 = pneg %p164
        %s277 = sand.u32 %s154, 1
        %s278 = scalar_lea.sflag [#allocation5], %s277
        %s279 = sand.u32 %s154, 1
        %s280 = smul.addr %s279, 8
        %s281 = scalar_lea.vmem [#allocation9], %s280
        %s282 = smul.u32 4, %s29
        %p284 = scmp.eq.s32.totalorder %s29, 0
        // Predicated region
        $region49: #{tpu_custom_call.1} parent=35 // pred_check
          %p285 = pneg %p284
        $region50: #{tpu_custom_call.1} parent=35 // pred_check_branch
          %287 = sbr.rel (%p285) target = $region52
        $region51: #{tpu_custom_call.1} parent=35 // pred_region
          %vm288 = vcmask 523264
          %289 = vst.msk [vmem:[#allocation2] sm:$0xff] %vm288, 0.0
        $region52: #{tpu_custom_call.1} parent=35 // pred_fallthru
          _
        %v290 = vld [vmem:[#allocation2] sm:$0xff]
        %v291 = vld [vmem:[%s249] sm:$0xff]
        %v292 = vpack.c.bf16 %v291, %v291
        %v293 = vld [vmem:[#allocation6] sm:$0xf]
        %v294 = vld [vmem:[#allocation6 + $0x4] sm:$0xf]
        %v295 = vld [vmem:[#allocation6 + $0x8] sm:$0xf]
        %v296 = vld [vmem:[#allocation6 + $0xc] sm:$0xf]
        %v301 = vunpack.c.l.b16 %v293
        %v302 = vunpack.c.l.b16 %v294
        %v303 = vunpack.c.l.b16 %v295
        %v304 = vunpack.c.l.b16 %v296
        %v305 = vpack.c.b16 %v302, %v301
        %v306 = vpack.c.b16 %v304, %v303
        %vm309 = vcmask 261120
        %v311 = vsel %vm309, %v292, 0
        %313 = vmatprep.subr.bf16.mxu0 0
        %314 = vmatpush1.bf16.msra.mxu0 0
        %315 = vmatprep.subr.bf16.mxu0 0
        %316 = vmatpush1.bf16.msra.mxu0 0
        %317 = vmatprep.subr.bf16.mxu0 0
        %318 = vmatpush1.bf16.msra.mxu0 0
        %319 = vmatprep.subr.bf16.mxu0 0
        %320 = vmatpush1.bf16.msra.mxu0 0
        %321 = vmatprep.subr.bf16.mxu0 0
        %322 = vmatpush1.bf16.msra.mxu0 0
        %323 = vmatprep.subr.bf16.mxu0 0
        %324 = vmatpush1.bf16.msra.mxu0 0
        %325 = vmatprep.subr.bf16.mxu0 0
        %326 = vmatpush1.bf16.msra.mxu0 %v306
        %327 = vmatprep.subr.bf16.mxu0 0
        %328 = vmatpush1.bf16.msra.mxu0 %v305
        %329 = vmatprep.subr.bf16.mxu0 0
        %330 = vmatpush2.bf16.msra.mxu0 0
        %331 = vmatprep.subr.bf16.mxu0 0
        %332 = vmatpush2.bf16.msra.mxu0 0
        %333 = vmatprep.subr.bf16.mxu0 0
        %334 = vmatpush2.bf16.msra.mxu0 0
        %335 = vmatprep.subr.bf16.mxu0 0
        %336 = vmatpush2.bf16.msra.mxu0 0
        %337 = vmatprep.subr.bf16.mxu0 0
        %338 = vmatpush2.bf16.msra.mxu0 0
        %339 = vmatprep.subr.bf16.mxu0 0
        %340 = vmatpush2.bf16.msra.mxu0 0
        %341 = vmatprep.subr.bf16.mxu0 0
        %342 = vmatpush2.bf16.msra.mxu0 0
        %343 = vmatprep.subr.bf16.mxu0 0
        %344 = vmatpush2.bf16.msra.mxu0 0
        %345 = vmatprep.mubr.bf16.mxu0 0
        %346 = vmatmul.mubr.bf16.gmra.mxu0 %v311
        %v347 = vpop.f32.mrf.mxu0
        %v348 = vadd.f32 0.0, %v347
        %v349 = vpop.f32.mrf.mxu0
        %v350 = vpop.f32.mrf.mxu0
        %v351 = vpop.f32.mrf.mxu0
        %352 = vdwg.mxu0
        %v353 = vadd.f32 %v290, %v348
        %vm354 = vcmask 523264
        %355 = vst.msk [vmem:[#allocation2] sm:$0xff] %vm354, %v353
        // Predicated region
        $region53: #{tpu_custom_call.1} parent=35 // pred_check
          %p356 = pneg %p284
        $region54: #{tpu_custom_call.1} parent=35 // pred_check_branch
          %358 = sbr.rel (%p356) target = $region56
        $region55: #{tpu_custom_call.1} parent=35 // pred_region
          %v359 = vld [vmem:[#allocation2] sm:$0xff]
          %v360 = vld [vmem:[%s2] sm:$0x1]
          %v362 = vlaneseq
          %v363 = vshrl.u32 %v362, 7
          %v364 = vsub.s32 0, %v363
          %v365 = vrot.slane %v360, %v364
          %v367 = vadd.f32 %v359, %v365
          %v368 = vmul.f32 %v367, 8.0
          %v369 = vld [vmem:[#allocation8] sm:$0xff]
          %v370 = vadd.f32 %v368, %v369
          %371 = vst.msk [vmem:[%s281] sm:$0xff] %vm354, %v370
        $region56: #{tpu_custom_call.1} parent=35 // pred_fallthru
          _
        %s372 = sand.u32 %s154, 1
        %s373 = scalar_lea.sflag [#allocation5], %s372
        %s374 = sand.u32 %s154, 1
        %s375 = smul.addr %s374, 8
        %s376 = scalar_lea.vmem [#allocation9], %s375
        // Predicated region
        $region57: #{tpu_custom_call.1} parent=35 // pred_check
          %p377 = pneg %p164
        $region58: #{tpu_custom_call.1} parent=35 // pred_check_branch
          %379 = sbr.rel (%p377) target = $region60
        $region59: #{tpu_custom_call.1} parent=35 // pred_region
          %s381 = ssub.s32 128, 128
          %382 = vsyncadd %s373, %s381
          %s383 = sadd.s32 %s28, %s27
          %s384 = smul.addr %s383, 128
          %s385 = scalar_lea.hbm %s4, %s384
          %s387 = sshll.u32 %s376, 4
          %s388 = int_to_ptr.vmem [resolvable:$true] %s387
          %390 = dma.vmem_to_hbm [thread:$0]  %s388, 128, %s385, %s373
        $region60: #{tpu_custom_call.1} parent=35 // pred_fallthru
          _
      $region36: #{tpu_custom_call.1} parent=5 // pred_fallthru
        _
      %p391 = scmp.le.s32.totalorder 2, %s17
      // Predicated region
      $region61: #{tpu_custom_call.1} parent=5 // pred_check
        %p392 = pneg %p391
      $region62: #{tpu_custom_call.1} parent=5 // pred_check_branch
        %394 = sbr.rel (%p392) target = $region64
      $region63: #{tpu_custom_call.1} parent=5 // pred_region
        %s395 = ssub.s32 %s17, 2
        // Predicated region
        $region65: #{tpu_custom_call.1} parent=63 // pred_check
          %p396 = pneg %p170
        $region66: #{tpu_custom_call.1} parent=63 // pred_check_branch
          %398 = sbr.rel (%p396) target = $region68
        $region67: #{tpu_custom_call.1} parent=63 // pred_region
          %s399 = sand.u32 %s155, 1
          %s400 = scalar_lea.sflag [#allocation5], %s399
          %s401 = sand.u32 %s155, 1
          %s402 = smul.addr %s401, 8
          %s403 = scalar_lea.vmem [#allocation9], %s402
          %404 = dma.done %s400, 128
        $region68: #{tpu_custom_call.1} parent=63 // pred_fallthru
          _
      $region64: #{tpu_custom_call.1} parent=5 // pred_fallthru
        _
    $region6: #{tpu_custom_call.1} parent=1 // loop_footer
      %s21 = sadd.s32 1, %s17
    $region7: #{tpu_custom_call.1} parent=1 // loop_footer_branch
      %16 = sbr.rel target = $region3
    $region8: #{tpu_custom_call.1} parent=1 // loop_exit
      _
    %405 = vsyncpa [#allocation4], 1
    %s406 = scalar_lea.sflag [#allocation4], 1
    %407 = vsyncpa %s406, 1
    %408 = vsyncpa [#allocation7], 1
    %409 = vsyncpa [#allocation5], 1
    %s410 = scalar_lea.sflag [#allocation5], 1
    %411 = vsyncpa %s410, 1

</llo_original>
